<compile_context>
chip_gen: v6e
topology: v6e:2x2x1
jax: 0.10.0
libtpu: 0.0.40
codegen_flags: <defaults>
</compile_context>

<pallas_src>
import jax
import jax.numpy as jnp
from jax import lax
from jax.experimental import pallas as pl
from jax.experimental.pallas import tpu as pltpu


# ------------------------------ Pallas kernel ------------------------------ #

def _residual_block_kernel(x_ref, w1_ref, s1_ref, b1_ref, w2_ref, s2_ref,
                           b2_ref, o_ref, xp_ref):
    """Fused ResidualBlock forward (whole batch folded into lanes).

    x_ref  : (H, N*W*C)          f32 input slab (batch folded into lanes)
    w*_ref : (3, N*W*C, N*W*C)   banded conv weights (compute dtype), one per ky
    s*/b*  : (1, N*W*C)          folded BN scale / bias, tiled over (N, W)
    o_ref  : (H, N*W*C)          output slab (dense 128-lane stores)
    xp_ref : (H+2, N*W*C)        f32 VMEM scratch: vertically zero-padded slab
    """
    H, NWC = o_ref.shape
    mm_dtype = w1_ref.dtype            # MXU input dtype (bf16 or f32)

    def conv3x3(w_ref):
        # 3 MXU matmuls, one per vertical tap; horizontal taps + SAME padding
        # are folded into the banded weights.  f32 accumulation.
        acc = jnp.dot(xp_ref[0:H, :].astype(mm_dtype), w_ref[0],
                      preferred_element_type=jnp.float32)
        acc = acc + jnp.dot(xp_ref[1:H + 1, :].astype(mm_dtype), w_ref[1],
                            preferred_element_type=jnp.float32)
        acc = acc + jnp.dot(xp_ref[2:H + 2, :].astype(mm_dtype), w_ref[2],
                            preferred_element_type=jnp.float32)
        return acc

    x = x_ref[...]                     # (H, N*W*C) f32, reused for the residual

    # Zero ONLY the two vertical-halo rows of the (uninitialised) scratch.
    # No lane halo exists (implicit horizontal padding), and the interior is
    # fully overwritten below.
    xp_ref[0:1, :] = jnp.zeros((1, NWC), xp_ref.dtype)
    xp_ref[H + 1:H + 2, :] = jnp.zeros((1, NWC), xp_ref.dtype)

    # ---- conv1 + BN + ReLU (f32 epilogue on the VPU) -------------------------
    xp_ref[1:H + 1, :] = x             # lane-offset-0, full-width dense store
    y = conv3x3(w1_ref) * s1_ref[...] + b1_ref[...]
    y = jnp.maximum(y, 0.0)

    # ---- conv2 + BN (reuse the slab; halo rows still zero) -------------------
    xp_ref[1:H + 1, :] = y
    y = conv3x3(w2_ref) * s2_ref[...] + b2_ref[...]

    # ---- residual add + ReLU, dense 128-lane store ---------------------------
    o_ref[...] = jnp.maximum(y + x, 0.0).astype(o_ref.dtype)


# -------------------------------- Wrapper ----------------------------------- #

def _banded_weights(w_hwio, W, N, dtype):
    """(3, 3, Cin, Cout) HWIO -> (3, N*W*Cin, N*W*Cout) banded matrices.

    For vertical tap ky (block-diagonal over batch b):
      band[ky][b*W*Cin + ix*Cin + ci, b*W*Cout + x*Cout + co] = w[ky, ix-x+1, ci, co]
    for |ix - x| <= 1, else 0.  Horizontal SAME padding is implicit: columns
    outside [0, W) simply contribute nothing (their band rows do not exist).
    """
    _, _, Cin, Cout = w_hwio.shape
    bands = []
    for ky in range(3):
        band = jnp.zeros((W * Cin, W * Cout), w_hwio.dtype)
        for kx in range(3):
            # ix == x + kx - 1  <=>  ones on diagonal k = 1 - kx
            shift = jnp.eye(W, k=1 - kx, dtype=w_hwio.dtype)
            band = band + jnp.kron(shift, w_hwio[ky, kx])
        band = jnp.kron(jnp.eye(N, dtype=w_hwio.dtype), band)   # block-diag batch
        bands.append(band)
    return jnp.stack(bands).astype(dtype)


def residual_block(x_nchw, params, *, compute_dtype=jnp.bfloat16):
    """Full ResidualBlock forward (stride=1, downsample=None). Returns NHWC.

    compute_dtype controls the MXU matmul input dtype (bf16 default — MXU-native
    on v5e/v6e/v7x); accumulation and the BN / residual / ReLU epilogue are f32.
    """
    N, C, H, W = x_nchw.shape
    NWC = N * W * C

    # NCHW -> (H, N*W*C): fold the batch into lanes so the activation / output /
    # accumulator lane width is N*W*C (=128 here): dense stores + full MXU
    # column occupancy.  Boundary transpose/reshape handled by XLA.
    x = jnp.transpose(x_nchw, (2, 0, 3, 1)).reshape(H, NWC)

    w1 = _banded_weights(params["w1"], W, N, compute_dtype)
    w2 = _banded_weights(params["w2"], W, N, compute_dtype)
    s1 = jnp.tile(params["scale1"], N * W).reshape(1, NWC).astype(jnp.float32)
    b1 = jnp.tile(params["bias1"], N * W).reshape(1, NWC).astype(jnp.float32)
    s2 = jnp.tile(params["scale2"], N * W).reshape(1, NWC).astype(jnp.float32)
    b2 = jnp.tile(params["bias2"], N * W).reshape(1, NWC).astype(jnp.float32)

    act_spec = pl.BlockSpec((H, NWC), lambda i: (0, 0))
    w_spec = pl.BlockSpec((3, NWC, NWC), lambda i: (0, 0, 0))
    vec_spec = pl.BlockSpec((1, NWC), lambda i: (0, 0))

    out = pl.pallas_call(
        _residual_block_kernel,
        out_shape=jax.ShapeDtypeStruct((H, NWC), x.dtype),
        grid_spec=pltpu.PrefetchScalarGridSpec(
            num_scalar_prefetch=0,
            grid=(1,),               # whole problem in one step: no per-step overhead
            in_specs=[act_spec, w_spec, vec_spec, vec_spec,
                      w_spec, vec_spec, vec_spec],
            out_specs=act_spec,
            scratch_shapes=[pltpu.VMEM((H + 2, NWC), jnp.float32)],
        ),
        compiler_params=pltpu.CompilerParams(
            dimension_semantics=("arbitrary",)),
    )(x, w1, s1, b1, w2, s2, b2)

    # (H, N*W*C) -> NHWC
    return jnp.transpose(out.reshape(H, N, W, C), (1, 0, 2, 3))


# ------------------------------- Reference ---------------------------------- #

def _ref_conv(x_nhwc, w_hwio):
    return lax.conv_general_dilated(
        x_nhwc, w_hwio, window_strides=(1, 1), padding="SAME",
        dimension_numbers=("NHWC", "HWIO", "NHWC"))


def residual_block_ref(x_nchw, params):
    x = jnp.transpose(x_nchw, (0, 2, 3, 1))
    y = _ref_conv(x, params["w1"]) * params["scale1"] + params["bias1"]
    y = jnp.maximum(y, 0.0)
    y = _ref_conv(y, params["w2"]) * params["scale2"] + params["bias2"]
    return jnp.maximum(y + x, 0.0)


def _fold_bn(gamma, beta, mean, var, eps=1e-5):
    scale = gamma / jnp.sqrt(var + eps)
    bias = beta - mean * scale
    return scale, bias


# ---------------------------------- Main ------------------------------------ #

if __name__ == "__main__":
    N, C, H, W = 2, 4, 16, 16   # in_channels == out_channels, stride=1
    key = jax.random.PRNGKey(0)
    ks = jax.random.split(key, 12)

    x_nchw = jax.random.normal(ks[0], (N, C, H, W), jnp.float32)

    # Conv weights in HWIO; Conv2d bias is folded into the BN bias term below.
    w1 = 0.1 * jax.random.normal(ks[1], (3, 3, C, C), jnp.float32)
    w2 = 0.1 * jax.random.normal(ks[2], (3, 3, C, C), jnp.float32)
    conv_b1 = 0.05 * jax.random.normal(ks[3], (C,), jnp.float32)
    conv_b2 = 0.05 * jax.random.normal(ks[4], (C,), jnp.float32)

    # BatchNorm (eval-mode) parameters.
    gamma1 = 1.0 + 0.1 * jax.random.normal(ks[5], (C,), jnp.float32)
    beta1 = 0.1 * jax.random.normal(ks[6], (C,), jnp.float32)
    mean1 = 0.1 * jax.random.normal(ks[7], (C,), jnp.float32)
    var1 = 1.0 + 0.1 * jnp.abs(jax.random.normal(ks[8], (C,), jnp.float32))
    gamma2 = 1.0 + 0.1 * jax.random.normal(ks[9], (C,), jnp.float32)
    beta2 = 0.1 * jax.random.normal(ks[10], (C,), jnp.float32)
    mean2 = 0.05 * jax.random.normal(ks[11], (C,), jnp.float32)
    var2 = jnp.ones((C,), jnp.float32)

    s1, b1 = _fold_bn(gamma1, beta1, mean1 - conv_b1, var1)   # conv bias folded
    s2, b2 = _fold_bn(gamma2, beta2, mean2 - conv_b2, var2)

    params = {"w1": w1, "scale1": s1, "bias1": b1,
              "w2": w2, "scale2": s2, "bias2": b2}

    ref = residual_block_ref(x_nchw, params)

    # Exact-semantics check: f32 MXU matmuls.
    out_f32 = jax.block_until_ready(
        residual_block(x_nchw, params, compute_dtype=jnp.float32))
    assert out_f32.shape == (N, H, W, C)
    assert jnp.allclose(out_f32, ref, rtol=1e-4, atol=1e-4), (
        float(jnp.max(jnp.abs(out_f32 - ref))))

    # Default bf16-matmul fast path; f32 accumulation + epilogue.
    out_bf16 = jax.block_until_ready(residual_block(x_nchw, params))
    assert out_bf16.shape == (N, H, W, C)
    assert jnp.allclose(out_bf16, ref, rtol=5e-2, atol=5e-2), (
        float(jnp.max(jnp.abs(out_bf16 - ref))))

    print("KERNEL_OK")
</pallas_src>

<mosaic_0001>
module attributes {stable_mosaic.version = 11 : i64} {
  func.func @_residual_block_kernel(%arg0: i32, %arg1: memref<16x128xf32, #tpu.memory_space<vmem>>, %arg2: memref<3x128x128xf32, #tpu.memory_space<vmem>>, %arg3: memref<1x128xf32, #tpu.memory_space<vmem>>, %arg4: memref<1x128xf32, #tpu.memory_space<vmem>>, %arg5: memref<3x128x128xf32, #tpu.memory_space<vmem>>, %arg6: memref<1x128xf32, #tpu.memory_space<vmem>>, %arg7: memref<1x128xf32, #tpu.memory_space<vmem>>, %arg8: memref<16x128xf32, #tpu.memory_space<vmem>>, %arg9: memref<18x128xf32, #tpu.memory_space<vmem>>) attributes {dimension_semantics = [#tpu.dimension_semantics<arbitrary>], iteration_bounds = array<i64: 1>, scalar_prefetch = 0 : i64, scratch_operands = 1 : i64, tpu.core_type = #tpu.core_type<tc>, window_params = [{pipeline_mode = #tpu.pipeline_mode<synchronous>, transform_indices = @transform_0, window_bounds = array<i64: 16, 128>}, {pipeline_mode = #tpu.pipeline_mode<synchronous>, transform_indices = @transform_1, window_bounds = array<i64: 3, 128, 128>}, {pipeline_mode = #tpu.pipeline_mode<synchronous>, transform_indices = @transform_2, window_bounds = array<i64: 1, 128>}, {pipeline_mode = #tpu.pipeline_mode<synchronous>, transform_indices = @transform_3, window_bounds = array<i64: 1, 128>}, {pipeline_mode = #tpu.pipeline_mode<synchronous>, transform_indices = @transform_4, window_bounds = array<i64: 3, 128, 128>}, {pipeline_mode = #tpu.pipeline_mode<synchronous>, transform_indices = @transform_5, window_bounds = array<i64: 1, 128>}, {pipeline_mode = #tpu.pipeline_mode<synchronous>, transform_indices = @transform_6, window_bounds = array<i64: 1, 128>}, {pipeline_mode = #tpu.pipeline_mode<synchronous>, transform_indices = @transform_7, window_bounds = array<i64: 16, 128>}]} {
    %c0 = arith.constant 0 : index
    %c0_0 = arith.constant 0 : index
    %0 = vector.load %arg1[%c0, %c0_0] : memref<16x128xf32, #tpu.memory_space<vmem>>, vector<16x128xf32>
    %cst = arith.constant 0.000000e+00 : f32
    %1 = vector.broadcast %cst : f32 to vector<1x128xf32>
    %c0_1 = arith.constant 0 : index
    %c0_2 = arith.constant 0 : index
    %2 = vector.load %arg9[%c0_1, %c0_2] : memref<18x128xf32, #tpu.memory_space<vmem>>, vector<1x128xf32>
    tpu.vector_store %arg9[%c0_1, %c0_2], %1 {strides = array<i32>} : memref<18x128xf32, #tpu.memory_space<vmem>>, vector<1x128xf32>,
    %cst_3 = arith.constant 0.000000e+00 : f32
    %3 = vector.broadcast %cst_3 : f32 to vector<1x128xf32>
    %c17 = arith.constant 17 : index
    %c0_4 = arith.constant 0 : index
    %4 = vector.load %arg9[%c17, %c0_4] : memref<18x128xf32, #tpu.memory_space<vmem>>, vector<1x128xf32>
    tpu.vector_store %arg9[%c17, %c0_4], %3 {strides = array<i32>} : memref<18x128xf32, #tpu.memory_space<vmem>>, vector<1x128xf32>,
    %c1 = arith.constant 1 : index
    %c0_5 = arith.constant 0 : index
    %5 = vector.load %arg9[%c1, %c0_5] : memref<18x128xf32, #tpu.memory_space<vmem>>, vector<16x128xf32>
    tpu.vector_store %arg9[%c1, %c0_5], %0 {strides = array<i32>} : memref<18x128xf32, #tpu.memory_space<vmem>>, vector<16x128xf32>,
    %c0_6 = arith.constant 0 : index
    %c0_7 = arith.constant 0 : index
    %6 = vector.load %arg9[%c0_6, %c0_7] : memref<18x128xf32, #tpu.memory_space<vmem>>, vector<16x128xf32>
    %c0_8 = arith.constant 0 : index
    %c0_9 = arith.constant 0 : index
    %c0_10 = arith.constant 0 : index
    %7 = vector.load %arg2[%c0_8, %c0_9, %c0_10] : memref<3x128x128xf32, #tpu.memory_space<vmem>>, vector<1x128x128xf32>
    %8 = vector.shape_cast %7 : vector<1x128x128xf32> to vector<128x128xf32>
    %cst_11 = arith.constant dense<0.000000e+00> : vector<16x128xf32>
    %9 = tpu.matmul %6, %8, %cst_11 {dimension_numbers = #tpu.dot_dimension_numbers<[1], [0], [0], [1], [0, 0, 1, 1], [], []>} : vector<16x128xf32>, vector<128x128xf32>, vector<16x128xf32> -> vector<16x128xf32>
    %c1_12 = arith.constant 1 : index
    %c0_13 = arith.constant 0 : index
    %10 = vector.load %arg9[%c1_12, %c0_13] : memref<18x128xf32, #tpu.memory_space<vmem>>, vector<16x128xf32>
    %c1_14 = arith.constant 1 : index
    %c0_15 = arith.constant 0 : index
    %c0_16 = arith.constant 0 : index
    %11 = vector.load %arg2[%c1_14, %c0_15, %c0_16] : memref<3x128x128xf32, #tpu.memory_space<vmem>>, vector<1x128x128xf32>
    %12 = vector.shape_cast %11 : vector<1x128x128xf32> to vector<128x128xf32>
    %cst_17 = arith.constant dense<0.000000e+00> : vector<16x128xf32>
    %13 = tpu.matmul %10, %12, %cst_17 {dimension_numbers = #tpu.dot_dimension_numbers<[1], [0], [0], [1], [0, 0, 1, 1], [], []>} : vector<16x128xf32>, vector<128x128xf32>, vector<16x128xf32> -> vector<16x128xf32>
    %14 = arith.addf %9, %13 : vector<16x128xf32>
    %c2 = arith.constant 2 : index
    %c0_18 = arith.constant 0 : index
    %15 = vector.load %arg9[%c2, %c0_18] : memref<18x128xf32, #tpu.memory_space<vmem>>, vector<16x128xf32>
    %c2_19 = arith.constant 2 : index
    %c0_20 = arith.constant 0 : index
    %c0_21 = arith.constant 0 : index
    %16 = vector.load %arg2[%c2_19, %c0_20, %c0_21] : memref<3x128x128xf32, #tpu.memory_space<vmem>>, vector<1x128x128xf32>
    %17 = vector.shape_cast %16 : vector<1x128x128xf32> to vector<128x128xf32>
    %cst_22 = arith.constant dense<0.000000e+00> : vector<16x128xf32>
    %18 = tpu.matmul %15, %17, %cst_22 {dimension_numbers = #tpu.dot_dimension_numbers<[1], [0], [0], [1], [0, 0, 1, 1], [], []>} : vector<16x128xf32>, vector<128x128xf32>, vector<16x128xf32> -> vector<16x128xf32>
    %19 = arith.addf %14, %18 : vector<16x128xf32>
    %c0_23 = arith.constant 0 : index
    %c0_24 = arith.constant 0 : index
    %20 = vector.load %arg3[%c0_23, %c0_24] : memref<1x128xf32, #tpu.memory_space<vmem>>, vector<1x128xf32>
    %21 = vector.broadcast %20 : vector<1x128xf32> to vector<16x128xf32>
    %22 = arith.mulf %19, %21 : vector<16x128xf32>
    %c0_25 = arith.constant 0 : index
    %c0_26 = arith.constant 0 : index
    %23 = vector.load %arg4[%c0_25, %c0_26] : memref<1x128xf32, #tpu.memory_space<vmem>>, vector<1x128xf32>
    %24 = vector.broadcast %23 : vector<1x128xf32> to vector<16x128xf32>
    %25 = arith.addf %22, %24 : vector<16x128xf32>
    %cst_27 = arith.constant 0.000000e+00 : f32
    %26 = vector.broadcast %cst_27 : f32 to vector<16x128xf32>
    %27 = arith.maximumf %25, %26 : vector<16x128xf32>
    %c1_28 = arith.constant 1 : index
    %c0_29 = arith.constant 0 : index
    %28 = vector.load %arg9[%c1_28, %c0_29] : memref<18x128xf32, #tpu.memory_space<vmem>>, vector<16x128xf32>
    tpu.vector_store %arg9[%c1_28, %c0_29], %27 {strides = array<i32>} : memref<18x128xf32, #tpu.memory_space<vmem>>, vector<16x128xf32>,
    %c0_30 = arith.constant 0 : index
    %c0_31 = arith.constant 0 : index
    %29 = vector.load %arg9[%c0_30, %c0_31] : memref<18x128xf32, #tpu.memory_space<vmem>>, vector<16x128xf32>
    %c0_32 = arith.constant 0 : index
    %c0_33 = arith.constant 0 : index
    %c0_34 = arith.constant 0 : index
    %30 = vector.load %arg5[%c0_32, %c0_33, %c0_34] : memref<3x128x128xf32, #tpu.memory_space<vmem>>, vector<1x128x128xf32>
    %31 = vector.shape_cast %30 : vector<1x128x128xf32> to vector<128x128xf32>
    %cst_35 = arith.constant dense<0.000000e+00> : vector<16x128xf32>
    %32 = tpu.matmul %29, %31, %cst_35 {dimension_numbers = #tpu.dot_dimension_numbers<[1], [0], [0], [1], [0, 0, 1, 1], [], []>} : vector<16x128xf32>, vector<128x128xf32>, vector<16x128xf32> -> vector<16x128xf32>
    %c1_36 = arith.constant 1 : index
    %c0_37 = arith.constant 0 : index
    %33 = vector.load %arg9[%c1_36, %c0_37] : memref<18x128xf32, #tpu.memory_space<vmem>>, vector<16x128xf32>
    %c1_38 = arith.constant 1 : index
    %c0_39 = arith.constant 0 : index
    %c0_40 = arith.constant 0 : index
    %34 = vector.load %arg5[%c1_38, %c0_39, %c0_40] : memref<3x128x128xf32, #tpu.memory_space<vmem>>, vector<1x128x128xf32>
    %35 = vector.shape_cast %34 : vector<1x128x128xf32> to vector<128x128xf32>
    %cst_41 = arith.constant dense<0.000000e+00> : vector<16x128xf32>
    %36 = tpu.matmul %33, %35, %cst_41 {dimension_numbers = #tpu.dot_dimension_numbers<[1], [0], [0], [1], [0, 0, 1, 1], [], []>} : vector<16x128xf32>, vector<128x128xf32>, vector<16x128xf32> -> vector<16x128xf32>
    %37 = arith.addf %32, %36 : vector<16x128xf32>
    %c2_42 = arith.constant 2 : index
    %c0_43 = arith.constant 0 : index
    %38 = vector.load %arg9[%c2_42, %c0_43] : memref<18x128xf32, #tpu.memory_space<vmem>>, vector<16x128xf32>
    %c2_44 = arith.constant 2 : index
    %c0_45 = arith.constant 0 : index
    %c0_46 = arith.constant 0 : index
    %39 = vector.load %arg5[%c2_44, %c0_45, %c0_46] : memref<3x128x128xf32, #tpu.memory_space<vmem>>, vector<1x128x128xf32>
    %40 = vector.shape_cast %39 : vector<1x128x128xf32> to vector<128x128xf32>
    %cst_47 = arith.constant dense<0.000000e+00> : vector<16x128xf32>
    %41 = tpu.matmul %38, %40, %cst_47 {dimension_numbers = #tpu.dot_dimension_numbers<[1], [0], [0], [1], [0, 0, 1, 1], [], []>} : vector<16x128xf32>, vector<128x128xf32>, vector<16x128xf32> -> vector<16x128xf32>
    %42 = arith.addf %37, %41 : vector<16x128xf32>
    %c0_48 = arith.constant 0 : index
    %c0_49 = arith.constant 0 : index
    %43 = vector.load %arg6[%c0_48, %c0_49] : memref<1x128xf32, #tpu.memory_space<vmem>>, vector<1x128xf32>
    %44 = vector.broadcast %43 : vector<1x128xf32> to vector<16x128xf32>
    %45 = arith.mulf %42, %44 : vector<16x128xf32>
    %c0_50 = arith.constant 0 : index
    %c0_51 = arith.constant 0 : index
    %46 = vector.load %arg7[%c0_50, %c0_51] : memref<1x128xf32, #tpu.memory_space<vmem>>, vector<1x128xf32>
    %47 = vector.broadcast %46 : vector<1x128xf32> to vector<16x128xf32>
    %48 = arith.addf %45, %47 : vector<16x128xf32>
    %49 = arith.addf %48, %0 : vector<16x128xf32>
    %cst_52 = arith.constant 0.000000e+00 : f32
    %50 = vector.broadcast %cst_52 : f32 to vector<16x128xf32>
    %51 = arith.maximumf %49, %50 : vector<16x128xf32>
    %c0_53 = arith.constant 0 : index
    %c0_54 = arith.constant 0 : index
    %52 = vector.load %arg8[%c0_53, %c0_54] : memref<16x128xf32, #tpu.memory_space<vmem>>, vector<16x128xf32>
    tpu.vector_store %arg8[%c0_53, %c0_54], %51 {strides = array<i32>} : memref<16x128xf32, #tpu.memory_space<vmem>>, vector<16x128xf32>,
    return
  }
  func.func @transform_0(%arg0: i32) -> (i32, i32) {
    %c0_i32 = arith.constant 0 : i32
    %c0_i32_0 = arith.constant 0 : i32
    %c0_i32_1 = arith.constant 0 : i32
    return %c0_i32, %c0_i32_0 : i32, i32
  }
  func.func @transform_1(%arg0: i32) -> (i32, i32, i32) {
    %c0_i32 = arith.constant 0 : i32
    %c0_i32_0 = arith.constant 0 : i32
    %c0_i32_1 = arith.constant 0 : i32
    %c0_i32_2 = arith.constant 0 : i32
    return %c0_i32, %c0_i32_0, %c0_i32_1 : i32, i32, i32
  }
  func.func @transform_2(%arg0: i32) -> (i32, i32) {
    %c0_i32 = arith.constant 0 : i32
    %c0_i32_0 = arith.constant 0 : i32
    %c0_i32_1 = arith.constant 0 : i32
    return %c0_i32, %c0_i32_0 : i32, i32
  }
  func.func @transform_3(%arg0: i32) -> (i32, i32) {
    %c0_i32 = arith.constant 0 : i32
    %c0_i32_0 = arith.constant 0 : i32
    %c0_i32_1 = arith.constant 0 : i32
    return %c0_i32, %c0_i32_0 : i32, i32
  }
  func.func @transform_4(%arg0: i32) -> (i32, i32, i32) {
    %c0_i32 = arith.constant 0 : i32
    %c0_i32_0 = arith.constant 0 : i32
    %c0_i32_1 = arith.constant 0 : i32
    %c0_i32_2 = arith.constant 0 : i32
    return %c0_i32, %c0_i32_0, %c0_i32_1 : i32, i32, i32
  }
  func.func @transform_5(%arg0: i32) -> (i32, i32) {
    %c0_i32 = arith.constant 0 : i32
    %c0_i32_0 = arith.constant 0 : i32
    %c0_i32_1 = arith.constant 0 : i32
    return %c0_i32, %c0_i32_0 : i32, i32
  }
  func.func @transform_6(%arg0: i32) -> (i32, i32) {
    %c0_i32 = arith.constant 0 : i32
    %c0_i32_0 = arith.constant 0 : i32
    %c0_i32_1 = arith.constant 0 : i32
    return %c0_i32, %c0_i32_0 : i32, i32
  }
  func.func @transform_7(%arg0: i32) -> (i32, i32) {
    %c0_i32 = arith.constant 0 : i32
    %c0_i32_0 = arith.constant 0 : i32
    %c0_i32_1 = arith.constant 0 : i32
    return %c0_i32, %c0_i32_0 : i32, i32
  }
}

</mosaic_0001>

<llo_original>
// kernel: tpu_custom_call.1
$region0: #{tpu_custom_call.1}
  #allocation0 [shape = 'u32[]', space=smem, size = 0x4, offset = 0x4, fixed_abs, tag = 'smem constant byte address 0x4 - core index']
  #allocation1 [shape = 'u32[144,128]{1,0:T(1,128)}', space=vmem, size = 0x12000, scoped, tag = 'internal scratch']
  #allocation2 [shape = 'f32[18,128]{1,0:T(8,128)}', space=vmem, size = 0x3000, scoped, tag = 'scratch operand']
  %s0 = inlined_call_operand.hbm [shape: f32[16,128], index: 0, kind: input, shape index: {}]
  %s1 = inlined_call_operand.hbm [shape: f32[3,128,128], index: 1, kind: input, shape index: {}]
  %s2 = inlined_call_operand.vmem [shape: f32[1,128], index: 2, kind: input, shape index: {}]
  %s3 = inlined_call_operand.vmem [shape: f32[1,128], index: 3, kind: input, shape index: {}]
  %s4 = inlined_call_operand.hbm [shape: f32[3,128,128], index: 4, kind: input, shape index: {}]
  %s5 = inlined_call_operand.vmem [shape: f32[1,128], index: 5, kind: input, shape index: {}]
  %s6 = inlined_call_operand.vmem [shape: f32[1,128], index: 6, kind: input, shape index: {}]
  %s7 = inlined_call_operand.hbm [shape: f32[16,128], index: 7, kind: output, shape index: {}]
  %s8 = sld [smem:[#allocation0]]
  $region50: #{tpu_custom_call.1} parent=0
    _
  %s10 = ssub.s32 1, %s8
  %s11 = scalar_select 0, %s10, %s8
  $region1: #{tpu_custom_call.1} parent=0
    #allocation3 [shape = 'u8[8192]{0}', space=vmem, size = 0x2000, scoped, tag = 'input window, operand 0, single buffered']
    #allocation4 [shape = 's32[1]{0}', space=sflag, size = 0x4, scoped, tag = 'scoped memory for tpu_custom_call.1']
    #allocation5 [shape = 's32[1]{0}', space=sflag, size = 0x4, scoped, tag = 'scoped memory for tpu_custom_call.1']
    #allocation6 [shape = 'u8[196608]{0}', space=vmem, size = 0x30000, scoped, tag = 'input window, operand 1, single buffered']
    #allocation7 [shape = 's32[1]{0}', space=sflag, size = 0x4, scoped, tag = 'scoped memory for tpu_custom_call.1']
    #allocation8 [shape = 'u8[196608]{0}', space=vmem, size = 0x30000, scoped, tag = 'input window, operand 4, single buffered']
    #allocation9 [shape = 'u8[8192]{0}', space=vmem, size = 0x2000, scoped, tag = 'output window, operand 0, single buffered']
    %12 = vsyncpa [#allocation4], 0
    %13 = vsyncpa [#allocation7], 0
    %14 = vsyncpa [#allocation5], 0
    // Predicated region
    $region2: #{tpu_custom_call.1} parent=1 // pred_check
      _
    $region3: #{tpu_custom_call.1} parent=1 // pred_check_branch
      %16 = sbr.rel (0) target = $region5
    $region4: #{tpu_custom_call.1} parent=1 // pred_region
      %s18 = ssub.s32 256, 256
      %19 = vsyncadd [#allocation4], %s18
      %s20 = sshll.u32 [#allocation3], 4
      %s21 = int_to_ptr.vmem [resolvable:$true] %s20
      %26 = dma.hbm_to_vmem [thread:$0]  %s0, 256, %s21, [#allocation4], 128, 128, 8
    $region5: #{tpu_custom_call.1} parent=1 // pred_fallthru
      _
    // Predicated region
    $region6: #{tpu_custom_call.1} parent=1 // pred_check
      _
    $region7: #{tpu_custom_call.1} parent=1 // pred_check_branch
      %28 = sbr.rel (0) target = $region9
    $region8: #{tpu_custom_call.1} parent=1 // pred_region
      %s30 = ssub.s32 6144, 6144
      %31 = vsyncadd [#allocation7], %s30
      %s32 = sshll.u32 [#allocation6], 4
      %s33 = int_to_ptr.vmem [resolvable:$true] %s32
      %38 = dma.hbm_to_vmem [thread:$0]  %s1, 6144, %s33, [#allocation7], 128, 128, 8
    $region9: #{tpu_custom_call.1} parent=1 // pred_fallthru
      _
    // Predicated region
    $region10: #{tpu_custom_call.1} parent=1 // pred_check
      _
    $region11: #{tpu_custom_call.1} parent=1 // pred_check_branch
      %40 = sbr.rel (0) target = $region13
    $region12: #{tpu_custom_call.1} parent=1 // pred_region
      _
    $region13: #{tpu_custom_call.1} parent=1 // pred_fallthru
      _
    // Predicated region
    $region14: #{tpu_custom_call.1} parent=1 // pred_check
      _
    $region15: #{tpu_custom_call.1} parent=1 // pred_check_branch
      %42 = sbr.rel (0) target = $region17
    $region16: #{tpu_custom_call.1} parent=1 // pred_region
      _
    $region17: #{tpu_custom_call.1} parent=1 // pred_fallthru
      _
    // Predicated region
    $region18: #{tpu_custom_call.1} parent=1 // pred_check
      _
    $region19: #{tpu_custom_call.1} parent=1 // pred_check_branch
      %44 = sbr.rel (0) target = $region21
    $region20: #{tpu_custom_call.1} parent=1 // pred_region
      %s46 = ssub.s32 6144, 6144
      %47 = vsyncadd [#allocation7], %s46
      %s48 = sshll.u32 [#allocation8], 4
      %s49 = int_to_ptr.vmem [resolvable:$true] %s48
      %54 = dma.hbm_to_vmem [thread:$0]  %s4, 6144, %s49, [#allocation7], 128, 128, 8
    $region21: #{tpu_custom_call.1} parent=1 // pred_fallthru
      _
    // Predicated region
    $region22: #{tpu_custom_call.1} parent=1 // pred_check
      _
    $region23: #{tpu_custom_call.1} parent=1 // pred_check_branch
      %56 = sbr.rel (0) target = $region25
    $region24: #{tpu_custom_call.1} parent=1 // pred_region
      _
    $region25: #{tpu_custom_call.1} parent=1 // pred_fallthru
      _
    // Predicated region
    $region26: #{tpu_custom_call.1} parent=1 // pred_check
      _
    $region27: #{tpu_custom_call.1} parent=1 // pred_check_branch
      %58 = sbr.rel (0) target = $region29
    $region28: #{tpu_custom_call.1} parent=1 // pred_region
      _
    $region29: #{tpu_custom_call.1} parent=1 // pred_fallthru
      _
    // Predicated region
    $region30: #{tpu_custom_call.1} parent=1 // pred_check
      _
    $region31: #{tpu_custom_call.1} parent=1 // pred_check_branch
      %60 = sbr.rel (0) target = $region33
    $region32: #{tpu_custom_call.1} parent=1 // pred_region
      %61 = dma.done [#allocation4], 256
    $region33: #{tpu_custom_call.1} parent=1 // pred_fallthru
      _
    // Predicated region
    $region34: #{tpu_custom_call.1} parent=1 // pred_check
      _
    $region35: #{tpu_custom_call.1} parent=1 // pred_check_branch
      %63 = sbr.rel (0) target = $region37
    $region36: #{tpu_custom_call.1} parent=1 // pred_region
      %64 = dma.done [#allocation7], 6144
    $region37: #{tpu_custom_call.1} parent=1 // pred_fallthru
      _
    // Predicated region
    $region38: #{tpu_custom_call.1} parent=1 // pred_check
      _
    $region39: #{tpu_custom_call.1} parent=1 // pred_check_branch
      %66 = sbr.rel (0) target = $region41
    $region40: #{tpu_custom_call.1} parent=1 // pred_region
      %67 = dma.done [#allocation7], 6144
    $region41: #{tpu_custom_call.1} parent=1 // pred_fallthru
      _
    %v68 = vld [vmem:[#allocation3] sm:$0xff]
    %v69 = vld [vmem:[#allocation3 + $0x8] sm:$0xff]
    %70 = vst [vmem:[#allocation2] sm:$0x1] 0.0
    %71 = vst [vmem:[#allocation2 + $0x11] sm:$0x1] 0.0
    %72 = vst [vmem:[#allocation2 + $0x1] sm:$0xff] %v68
    %73 = vst [vmem:[#allocation2 + $0x9] sm:$0xff] %v69
    %v74 = vld [vmem:[#allocation2] sm:$0xff]
    %v75 = vld [vmem:[#allocation2 + $0x8] sm:$0xff]
    %v76 = vld [vmem:[#allocation6] sm:$0xff]
    %v77 = vld [vmem:[#allocation6 + $0x8] sm:$0xff]
    %v78 = vld [vmem:[#allocation6 + $0x10] sm:$0xff]
    %v79 = vld [vmem:[#allocation6 + $0x18] sm:$0xff]
    %v80 = vld [vmem:[#allocation6 + $0x20] sm:$0xff]
    %v81 = vld [vmem:[#allocation6 + $0x28] sm:$0xff]
    %v82 = vld [vmem:[#allocation6 + $0x30] sm:$0xff]
    %v83 = vld [vmem:[#allocation6 + $0x38] sm:$0xff]
    %v84 = vld [vmem:[#allocation6 + $0x40] sm:$0xff]
    %v85 = vld [vmem:[#allocation6 + $0x48] sm:$0xff]
    %v86 = vld [vmem:[#allocation6 + $0x50] sm:$0xff]
    %v87 = vld [vmem:[#allocation6 + $0x58] sm:$0xff]
    %v88 = vld [vmem:[#allocation6 + $0x60] sm:$0xff]
    %v89 = vld [vmem:[#allocation6 + $0x68] sm:$0xff]
    %v90 = vld [vmem:[#allocation6 + $0x70] sm:$0xff]
    %v91 = vld [vmem:[#allocation6 + $0x78] sm:$0xff]
    %v92 = vld [vmem:[#allocation2 + $0x1] sm:$0xff]
    %v93 = vld [vmem:[#allocation2 + $0x9] sm:$0xff]
    %s94 = scalar_lea.vmem [#allocation6], 128
    %v95 = vld [vmem:[%s94] sm:$0xff]
    %v96 = vld [vmem:[%s94 + $0x8] sm:$0xff]
    %v97 = vld [vmem:[%s94 + $0x10] sm:$0xff]
    %v98 = vld [vmem:[%s94 + $0x18] sm:$0xff]
    %v99 = vld [vmem:[%s94 + $0x20] sm:$0xff]
    %v100 = vld [vmem:[%s94 + $0x28] sm:$0xff]
    %v101 = vld [vmem:[%s94 + $0x30] sm:$0xff]
    %v102 = vld [vmem:[%s94 + $0x38] sm:$0xff]
    %v103 = vld [vmem:[%s94 + $0x40] sm:$0xff]
    %v104 = vld [vmem:[%s94 + $0x48] sm:$0xff]
    %v105 = vld [vmem:[%s94 + $0x50] sm:$0xff]
    %v106 = vld [vmem:[%s94 + $0x58] sm:$0xff]
    %v107 = vld [vmem:[%s94 + $0x60] sm:$0xff]
    %v108 = vld [vmem:[%s94 + $0x68] sm:$0xff]
    %v109 = vld [vmem:[%s94 + $0x70] sm:$0xff]
    %v110 = vld [vmem:[%s94 + $0x78] sm:$0xff]
    %111 = vmatprep.subr.mxu0 0.0
    %112 = vmatpush1.msra.mxu0 %v110
    %113 = vmatprep.subr.mxu0 0.0
    %114 = vmatpush1.msra.mxu0 %v109
    %115 = vmatprep.subr.mxu0 0.0
    %116 = vmatpush1.msra.mxu0 %v108
    %117 = vmatprep.subr.mxu0 0.0
    %118 = vmatpush1.msra.mxu0 %v107
    %119 = vmatprep.subr.mxu0 0.0
    %120 = vmatpush1.msra.mxu0 %v106
    %121 = vmatprep.subr.mxu0 0.0
    %122 = vmatpush1.msra.mxu0 %v105
    %123 = vmatprep.subr.mxu0 0.0
    %124 = vmatpush1.msra.mxu0 %v104
    %125 = vmatprep.subr.mxu0 0.0
    %126 = vmatpush1.msra.mxu0 %v103
    %127 = vmatprep.subr.mxu0 0.0
    %128 = vmatpush1.msra.mxu0 %v102
    %129 = vmatprep.subr.mxu0 0.0
    %130 = vmatpush1.msra.mxu0 %v101
    %131 = vmatprep.subr.mxu0 0.0
    %132 = vmatpush1.msra.mxu0 %v100
    %133 = vmatprep.subr.mxu0 0.0
    %134 = vmatpush1.msra.mxu0 %v99
    %135 = vmatprep.subr.mxu0 0.0
    %136 = vmatpush1.msra.mxu0 %v98
    %137 = vmatprep.subr.mxu0 0.0
    %138 = vmatpush1.msra.mxu0 %v97
    %139 = vmatprep.subr.mxu0 0.0
    %140 = vmatpush1.msra.mxu0 %v96
    %141 = vmatprep.subr.mxu0 0.0
    %142 = vmatpush1.msra.mxu0 %v95
    %143 = vmatprep.subr.mxu0 0.0
    %144 = vmatpush2.msra.mxu0 0.0
    %145 = vmatprep.subr.mxu0 0.0
    %146 = vmatpush2.msra.mxu0 0.0
    %147 = vmatprep.subr.mxu0 0.0
    %148 = vmatpush2.msra.mxu0 0.0
    %149 = vmatprep.subr.mxu0 0.0
    %150 = vmatpush2.msra.mxu0 0.0
    %151 = vmatprep.subr.mxu0 0.0
    %152 = vmatpush2.msra.mxu0 0.0
    %153 = vmatprep.subr.mxu0 0.0
    %154 = vmatpush2.msra.mxu0 0.0
    %155 = vmatprep.subr.mxu0 0.0
    %156 = vmatpush2.msra.mxu0 0.0
    %157 = vmatprep.subr.mxu0 0.0
    %158 = vmatpush2.msra.mxu0 0.0
    %159 = vmatprep.subr.mxu0 0.0
    %160 = vmatpush2.msra.mxu0 0.0
    %161 = vmatprep.subr.mxu0 0.0
    %162 = vmatpush2.msra.mxu0 0.0
    %163 = vmatprep.subr.mxu0 0.0
    %164 = vmatpush2.msra.mxu0 0.0
    %165 = vmatprep.subr.mxu0 0.0
    %166 = vmatpush2.msra.mxu0 0.0
    %167 = vmatprep.subr.mxu0 0.0
    %168 = vmatpush2.msra.mxu0 0.0
    %169 = vmatprep.subr.mxu0 0.0
    %170 = vmatpush2.msra.mxu0 0.0
    %171 = vmatprep.subr.mxu0 0.0
    %172 = vmatpush2.msra.mxu0 0.0
    %173 = vmatprep.subr.mxu0 0.0
    %174 = vmatpush2.msra.mxu0 0.0
    %175 = vmatprep.mubr.f32.mxu0 0.0
    %176 = vmatmul.mubr.f32.gmra.mxu0 %v92
    %v177 = vpop.f32.mrf.mxu0
    %v178 = vadd.f32 0.0, %v177
    %v179 = vpop.f32.mrf.mxu0
    %180 = vmatprep.mubr.f32.mxu0 0.0
    %181 = vmatmul.mubr.f32.gmra.mxu0 %v93
    %v182 = vpop.f32.mrf.mxu0
    %v183 = vadd.f32 0.0, %v182
    %v184 = vpop.f32.mrf.mxu0
    %185 = vdwg.mxu0
    %186 = vmatprep.subr.mxu0 0.0
    %187 = vmatpush1.msra.mxu0 %v91
    %188 = vmatprep.subr.mxu0 0.0
    %189 = vmatpush1.msra.mxu0 %v90
    %190 = vmatprep.subr.mxu0 0.0
    %191 = vmatpush1.msra.mxu0 %v89
    %192 = vmatprep.subr.mxu0 0.0
    %193 = vmatpush1.msra.mxu0 %v88
    %194 = vmatprep.subr.mxu0 0.0
    %195 = vmatpush1.msra.mxu0 %v87
    %196 = vmatprep.subr.mxu0 0.0
    %197 = vmatpush1.msra.mxu0 %v86
    %198 = vmatprep.subr.mxu0 0.0
    %199 = vmatpush1.msra.mxu0 %v85
    %200 = vmatprep.subr.mxu0 0.0
    %201 = vmatpush1.msra.mxu0 %v84
    %202 = vmatprep.subr.mxu0 0.0
    %203 = vmatpush1.msra.mxu0 %v83
    %204 = vmatprep.subr.mxu0 0.0
    %205 = vmatpush1.msra.mxu0 %v82
    %206 = vmatprep.subr.mxu0 0.0
    %207 = vmatpush1.msra.mxu0 %v81
    %208 = vmatprep.subr.mxu0 0.0
    %209 = vmatpush1.msra.mxu0 %v80
    %210 = vmatprep.subr.mxu0 0.0
    %211 = vmatpush1.msra.mxu0 %v79
    %212 = vmatprep.subr.mxu0 0.0
    %213 = vmatpush1.msra.mxu0 %v78
    %214 = vmatprep.subr.mxu0 0.0
    %215 = vmatpush1.msra.mxu0 %v77
    %216 = vmatprep.subr.mxu0 0.0
    %217 = vmatpush1.msra.mxu0 %v76
    %218 = vmatprep.subr.mxu0 0.0
    %219 = vmatpush2.msra.mxu0 0.0
    %220 = vmatprep.subr.mxu0 0.0
    %221 = vmatpush2.msra.mxu0 0.0
    %222 = vmatprep.subr.mxu0 0.0
    %223 = vmatpush2.msra.mxu0 0.0
    %224 = vmatprep.subr.mxu0 0.0
    %225 = vmatpush2.msra.mxu0 0.0
    %226 = vmatprep.subr.mxu0 0.0
    %227 = vmatpush2.msra.mxu0 0.0
    %228 = vmatprep.subr.mxu0 0.0
    %229 = vmatpush2.msra.mxu0 0.0
    %230 = vmatprep.subr.mxu0 0.0
    %231 = vmatpush2.msra.mxu0 0.0
    %232 = vmatprep.subr.mxu0 0.0
    %233 = vmatpush2.msra.mxu0 0.0
    %234 = vmatprep.subr.mxu0 0.0
    %235 = vmatpush2.msra.mxu0 0.0
    %236 = vmatprep.subr.mxu0 0.0
    %237 = vmatpush2.msra.mxu0 0.0
    %238 = vmatprep.subr.mxu0 0.0
    %239 = vmatpush2.msra.mxu0 0.0
    %240 = vmatprep.subr.mxu0 0.0
    %241 = vmatpush2.msra.mxu0 0.0
    %242 = vmatprep.subr.mxu0 0.0
    %243 = vmatpush2.msra.mxu0 0.0
    %244 = vmatprep.subr.mxu0 0.0
    %245 = vmatpush2.msra.mxu0 0.0
    %246 = vmatprep.subr.mxu0 0.0
    %247 = vmatpush2.msra.mxu0 0.0
    %248 = vmatprep.subr.mxu0 0.0
    %249 = vmatpush2.msra.mxu0 0.0
    %250 = vmatprep.mubr.f32.mxu0 0.0
    %251 = vmatmul.mubr.f32.gmra.mxu0 %v74
    %v252 = vpop.f32.mrf.mxu0
    %v253 = vadd.f32 %v178, %v252
    %v254 = vpop.f32.mrf.mxu0
    %255 = vmatprep.mubr.f32.mxu0 0.0
    %256 = vmatmul.mubr.f32.gmra.mxu0 %v75
    %v257 = vpop.f32.mrf.mxu0
    %v258 = vadd.f32 %v183, %v257
    %v259 = vpop.f32.mrf.mxu0
    %260 = vdwg.mxu0
    %v261 = vld [vmem:[#allocation2 + $0x2] sm:$0xff]
    %v262 = vld [vmem:[#allocation2 + $0xa] sm:$0xff]
    %s263 = scalar_lea.vmem [#allocation6], 256
    %v264 = vld [vmem:[%s263] sm:$0xff]
    %v265 = vld [vmem:[%s263 + $0x8] sm:$0xff]
    %v266 = vld [vmem:[%s263 + $0x10] sm:$0xff]
    %v267 = vld [vmem:[%s263 + $0x18] sm:$0xff]
    %v268 = vld [vmem:[%s263 + $0x20] sm:$0xff]
    %v269 = vld [vmem:[%s263 + $0x28] sm:$0xff]
    %v270 = vld [vmem:[%s263 + $0x30] sm:$0xff]
    %v271 = vld [vmem:[%s263 + $0x38] sm:$0xff]
    %v272 = vld [vmem:[%s263 + $0x40] sm:$0xff]
    %v273 = vld [vmem:[%s263 + $0x48] sm:$0xff]
    %v274 = vld [vmem:[%s263 + $0x50] sm:$0xff]
    %v275 = vld [vmem:[%s263 + $0x58] sm:$0xff]
    %v276 = vld [vmem:[%s263 + $0x60] sm:$0xff]
    %v277 = vld [vmem:[%s263 + $0x68] sm:$0xff]
    %v278 = vld [vmem:[%s263 + $0x70] sm:$0xff]
    %v279 = vld [vmem:[%s263 + $0x78] sm:$0xff]
    %280 = vmatprep.subr.mxu0 0.0
    %281 = vmatpush1.msra.mxu0 %v279
    %282 = vmatprep.subr.mxu0 0.0
    %283 = vmatpush1.msra.mxu0 %v278
    %284 = vmatprep.subr.mxu0 0.0
    %285 = vmatpush1.msra.mxu0 %v277
    %286 = vmatprep.subr.mxu0 0.0
    %287 = vmatpush1.msra.mxu0 %v276
    %288 = vmatprep.subr.mxu0 0.0
    %289 = vmatpush1.msra.mxu0 %v275
    %290 = vmatprep.subr.mxu0 0.0
    %291 = vmatpush1.msra.mxu0 %v274
    %292 = vmatprep.subr.mxu0 0.0
    %293 = vmatpush1.msra.mxu0 %v273
    %294 = vmatprep.subr.mxu0 0.0
    %295 = vmatpush1.msra.mxu0 %v272
    %296 = vmatprep.subr.mxu0 0.0
    %297 = vmatpush1.msra.mxu0 %v271
    %298 = vmatprep.subr.mxu0 0.0
    %299 = vmatpush1.msra.mxu0 %v270
    %300 = vmatprep.subr.mxu0 0.0
    %301 = vmatpush1.msra.mxu0 %v269
    %302 = vmatprep.subr.mxu0 0.0
    %303 = vmatpush1.msra.mxu0 %v268
    %304 = vmatprep.subr.mxu0 0.0
    %305 = vmatpush1.msra.mxu0 %v267
    %306 = vmatprep.subr.mxu0 0.0
    %307 = vmatpush1.msra.mxu0 %v266
    %308 = vmatprep.subr.mxu0 0.0
    %309 = vmatpush1.msra.mxu0 %v265
    %310 = vmatprep.subr.mxu0 0.0
    %311 = vmatpush1.msra.mxu0 %v264
    %312 = vmatprep.subr.mxu0 0.0
    %313 = vmatpush2.msra.mxu0 0.0
    %314 = vmatprep.subr.mxu0 0.0
    %315 = vmatpush2.msra.mxu0 0.0
    %316 = vmatprep.subr.mxu0 0.0
    %317 = vmatpush2.msra.mxu0 0.0
    %318 = vmatprep.subr.mxu0 0.0
    %319 = vmatpush2.msra.mxu0 0.0
    %320 = vmatprep.subr.mxu0 0.0
    %321 = vmatpush2.msra.mxu0 0.0
    %322 = vmatprep.subr.mxu0 0.0
    %323 = vmatpush2.msra.mxu0 0.0
    %324 = vmatprep.subr.mxu0 0.0
    %325 = vmatpush2.msra.mxu0 0.0
    %326 = vmatprep.subr.mxu0 0.0
    %327 = vmatpush2.msra.mxu0 0.0
    %328 = vmatprep.subr.mxu0 0.0
    %329 = vmatpush2.msra.mxu0 0.0
    %330 = vmatprep.subr.mxu0 0.0
    %331 = vmatpush2.msra.mxu0 0.0
    %332 = vmatprep.subr.mxu0 0.0
    %333 = vmatpush2.msra.mxu0 0.0
    %334 = vmatprep.subr.mxu0 0.0
    %335 = vmatpush2.msra.mxu0 0.0
    %336 = vmatprep.subr.mxu0 0.0
    %337 = vmatpush2.msra.mxu0 0.0
    %338 = vmatprep.subr.mxu0 0.0
    %339 = vmatpush2.msra.mxu0 0.0
    %340 = vmatprep.subr.mxu0 0.0
    %341 = vmatpush2.msra.mxu0 0.0
    %342 = vmatprep.subr.mxu0 0.0
    %343 = vmatpush2.msra.mxu0 0.0
    %344 = vmatprep.mubr.f32.mxu0 0.0
    %345 = vmatmul.mubr.f32.gmra.mxu0 %v261
    %v346 = vpop.f32.mrf.mxu0
    %v347 = vadd.f32 0.0, %v346
    %v348 = vpop.f32.mrf.mxu0
    %349 = vmatprep.mubr.f32.mxu0 0.0
    %350 = vmatmul.mubr.f32.gmra.mxu0 %v262
    %v351 = vpop.f32.mrf.mxu0
    %v352 = vadd.f32 0.0, %v351
    %v353 = vpop.f32.mrf.mxu0
    %354 = vdwg.mxu0
    %v355 = vadd.f32 %v253, %v347
    %v356 = vadd.f32 %v258, %v352
    %v357 = vld [vmem:[%s2] sm:$0x1]
    %v359 = vlaneseq
    %v360 = vshrl.u32 %v359, 7
    %v361 = vsub.s32 0, %v360
    %v362 = vrot.slane %v357, %v361
    %v364 = vmul.f32 %v355, %v362
    %v365 = vmul.f32 %v356, %v362
    %v366 = vld [vmem:[%s3] sm:$0x1]
    %v368 = vlaneseq
    %v369 = vshrl.u32 %v368, 7
    %v370 = vsub.s32 0, %v369
    %v371 = vrot.slane %v366, %v370
    %v373 = vadd.f32 %v364, %v371
    %v374 = vadd.f32 %v365, %v371
    %v375 = vmax.f32 %v373, 0.0
    %v376 = vmax.f32 %v374, 0.0
    %377 = vst [vmem:[#allocation2 + $0x1] sm:$0xff] %v375
    %378 = vst [vmem:[#allocation2 + $0x9] sm:$0xff] %v376
    %v379 = vld [vmem:[#allocation2] sm:$0xff]
    %v380 = vld [vmem:[#allocation2 + $0x8] sm:$0xff]
    %v381 = vld [vmem:[#allocation8] sm:$0xff]
    %v382 = vld [vmem:[#allocation8 + $0x8] sm:$0xff]
    %v383 = vld [vmem:[#allocation8 + $0x10] sm:$0xff]
    %v384 = vld [vmem:[#allocation8 + $0x18] sm:$0xff]
    %v385 = vld [vmem:[#allocation8 + $0x20] sm:$0xff]
    %v386 = vld [vmem:[#allocation8 + $0x28] sm:$0xff]
    %v387 = vld [vmem:[#allocation8 + $0x30] sm:$0xff]
    %v388 = vld [vmem:[#allocation8 + $0x38] sm:$0xff]
    %v389 = vld [vmem:[#allocation8 + $0x40] sm:$0xff]
    %v390 = vld [vmem:[#allocation8 + $0x48] sm:$0xff]
    %v391 = vld [vmem:[#allocation8 + $0x50] sm:$0xff]
    %v392 = vld [vmem:[#allocation8 + $0x58] sm:$0xff]
    %v393 = vld [vmem:[#allocation8 + $0x60] sm:$0xff]
    %v394 = vld [vmem:[#allocation8 + $0x68] sm:$0xff]
    %v395 = vld [vmem:[#allocation8 + $0x70] sm:$0xff]
    %v396 = vld [vmem:[#allocation8 + $0x78] sm:$0xff]
    %v397 = vld [vmem:[#allocation2 + $0x1] sm:$0xff]
    %v398 = vld [vmem:[#allocation2 + $0x9] sm:$0xff]
    %s399 = scalar_lea.vmem [#allocation8], 128
    %v400 = vld [vmem:[%s399] sm:$0xff]
    %v401 = vld [vmem:[%s399 + $0x8] sm:$0xff]
    %v402 = vld [vmem:[%s399 + $0x10] sm:$0xff]
    %v403 = vld [vmem:[%s399 + $0x18] sm:$0xff]
    %v404 = vld [vmem:[%s399 + $0x20] sm:$0xff]
    %v405 = vld [vmem:[%s399 + $0x28] sm:$0xff]
    %v406 = vld [vmem:[%s399 + $0x30] sm:$0xff]
    %v407 = vld [vmem:[%s399 + $0x38] sm:$0xff]
    %v408 = vld [vmem:[%s399 + $0x40] sm:$0xff]
    %v409 = vld [vmem:[%s399 + $0x48] sm:$0xff]
    %v410 = vld [vmem:[%s399 + $0x50] sm:$0xff]
    %v411 = vld [vmem:[%s399 + $0x58] sm:$0xff]
    %v412 = vld [vmem:[%s399 + $0x60] sm:$0xff]
    %v413 = vld [vmem:[%s399 + $0x68] sm:$0xff]
    %v414 = vld [vmem:[%s399 + $0x70] sm:$0xff]
    %v415 = vld [vmem:[%s399 + $0x78] sm:$0xff]
    %416 = vmatprep.subr.mxu0 0.0
    %417 = vmatpush1.msra.mxu0 %v415
    %418 = vmatprep.subr.mxu0 0.0
    %419 = vmatpush1.msra.mxu0 %v414
    %420 = vmatprep.subr.mxu0 0.0
    %421 = vmatpush1.msra.mxu0 %v413
    %422 = vmatprep.subr.mxu0 0.0
    %423 = vmatpush1.msra.mxu0 %v412
    %424 = vmatprep.subr.mxu0 0.0
    %425 = vmatpush1.msra.mxu0 %v411
    %426 = vmatprep.subr.mxu0 0.0
    %427 = vmatpush1.msra.mxu0 %v410
    %428 = vmatprep.subr.mxu0 0.0
    %429 = vmatpush1.msra.mxu0 %v409
    %430 = vmatprep.subr.mxu0 0.0
    %431 = vmatpush1.msra.mxu0 %v408
    %432 = vmatprep.subr.mxu0 0.0
    %433 = vmatpush1.msra.mxu0 %v407
    %434 = vmatprep.subr.mxu0 0.0
    %435 = vmatpush1.msra.mxu0 %v406
    %436 = vmatprep.subr.mxu0 0.0
    %437 = vmatpush1.msra.mxu0 %v405
    %438 = vmatprep.subr.mxu0 0.0
    %439 = vmatpush1.msra.mxu0 %v404
    %440 = vmatprep.subr.mxu0 0.0
    %441 = vmatpush1.msra.mxu0 %v403
    %442 = vmatprep.subr.mxu0 0.0
    %443 = vmatpush1.msra.mxu0 %v402
    %444 = vmatprep.subr.mxu0 0.0
    %445 = vmatpush1.msra.mxu0 %v401
    %446 = vmatprep.subr.mxu0 0.0
    %447 = vmatpush1.msra.mxu0 %v400
    %448 = vmatprep.subr.mxu0 0.0
    %449 = vmatpush2.msra.mxu0 0.0
    %450 = vmatprep.subr.mxu0 0.0
    %451 = vmatpush2.msra.mxu0 0.0
    %452 = vmatprep.subr.mxu0 0.0
    %453 = vmatpush2.msra.mxu0 0.0
    %454 = vmatprep.subr.mxu0 0.0
    %455 = vmatpush2.msra.mxu0 0.0
    %456 = vmatprep.subr.mxu0 0.0
    %457 = vmatpush2.msra.mxu0 0.0
    %458 = vmatprep.subr.mxu0 0.0
    %459 = vmatpush2.msra.mxu0 0.0
    %460 = vmatprep.subr.mxu0 0.0
    %461 = vmatpush2.msra.mxu0 0.0
    %462 = vmatprep.subr.mxu0 0.0
    %463 = vmatpush2.msra.mxu0 0.0
    %464 = vmatprep.subr.mxu0 0.0
    %465 = vmatpush2.msra.mxu0 0.0
    %466 = vmatprep.subr.mxu0 0.0
    %467 = vmatpush2.msra.mxu0 0.0
    %468 = vmatprep.subr.mxu0 0.0
    %469 = vmatpush2.msra.mxu0 0.0
    %470 = vmatprep.subr.mxu0 0.0
    %471 = vmatpush2.msra.mxu0 0.0
    %472 = vmatprep.subr.mxu0 0.0
    %473 = vmatpush2.msra.mxu0 0.0
    %474 = vmatprep.subr.mxu0 0.0
    %475 = vmatpush2.msra.mxu0 0.0
    %476 = vmatprep.subr.mxu0 0.0
    %477 = vmatpush2.msra.mxu0 0.0
    %478 = vmatprep.subr.mxu0 0.0
    %479 = vmatpush2.msra.mxu0 0.0
    %480 = vmatprep.mubr.f32.mxu0 0.0
    %481 = vmatmul.mubr.f32.gmra.mxu0 %v397
    %v482 = vpop.f32.mrf.mxu0
    %v483 = vadd.f32 0.0, %v482
    %v484 = vpop.f32.mrf.mxu0
    %485 = vmatprep.mubr.f32.mxu0 0.0
    %486 = vmatmul.mubr.f32.gmra.mxu0 %v398
    %v487 = vpop.f32.mrf.mxu0
    %v488 = vadd.f32 0.0, %v487
    %v489 = vpop.f32.mrf.mxu0
    %490 = vdwg.mxu0
    %491 = vmatprep.subr.mxu0 0.0
    %492 = vmatpush1.msra.mxu0 %v396
    %493 = vmatprep.subr.mxu0 0.0
    %494 = vmatpush1.msra.mxu0 %v395
    %495 = vmatprep.subr.mxu0 0.0
    %496 = vmatpush1.msra.mxu0 %v394
    %497 = vmatprep.subr.mxu0 0.0
    %498 = vmatpush1.msra.mxu0 %v393
    %499 = vmatprep.subr.mxu0 0.0
    %500 = vmatpush1.msra.mxu0 %v392
    %501 = vmatprep.subr.mxu0 0.0
    %502 = vmatpush1.msra.mxu0 %v391
    %503 = vmatprep.subr.mxu0 0.0
    %504 = vmatpush1.msra.mxu0 %v390
    %505 = vmatprep.subr.mxu0 0.0
    %506 = vmatpush1.msra.mxu0 %v389
    %507 = vmatprep.subr.mxu0 0.0
    %508 = vmatpush1.msra.mxu0 %v388
    %509 = vmatprep.subr.mxu0 0.0
    %510 = vmatpush1.msra.mxu0 %v387
    %511 = vmatprep.subr.mxu0 0.0
    %512 = vmatpush1.msra.mxu0 %v386
    %513 = vmatprep.subr.mxu0 0.0
    %514 = vmatpush1.msra.mxu0 %v385
    %515 = vmatprep.subr.mxu0 0.0
    %516 = vmatpush1.msra.mxu0 %v384
    %517 = vmatprep.subr.mxu0 0.0
    %518 = vmatpush1.msra.mxu0 %v383
    %519 = vmatprep.subr.mxu0 0.0
    %520 = vmatpush1.msra.mxu0 %v382
    %521 = vmatprep.subr.mxu0 0.0
    %522 = vmatpush1.msra.mxu0 %v381
    %523 = vmatprep.subr.mxu0 0.0
    %524 = vmatpush2.msra.mxu0 0.0
    %525 = vmatprep.subr.mxu0 0.0
    %526 = vmatpush2.msra.mxu0 0.0
    %527 = vmatprep.subr.mxu0 0.0
    %528 = vmatpush2.msra.mxu0 0.0
    %529 = vmatprep.subr.mxu0 0.0
    %530 = vmatpush2.msra.mxu0 0.0
    %531 = vmatprep.subr.mxu0 0.0
    %532 = vmatpush2.msra.mxu0 0.0
    %533 = vmatprep.subr.mxu0 0.0
    %534 = vmatpush2.msra.mxu0 0.0
    %535 = vmatprep.subr.mxu0 0.0
    %536 = vmatpush2.msra.mxu0 0.0
    %537 = vmatprep.subr.mxu0 0.0
    %538 = vmatpush2.msra.mxu0 0.0
    %539 = vmatprep.subr.mxu0 0.0
    %540 = vmatpush2.msra.mxu0 0.0
    %541 = vmatprep.subr.mxu0 0.0
    %542 = vmatpush2.msra.mxu0 0.0
    %543 = vmatprep.subr.mxu0 0.0
    %544 = vmatpush2.msra.mxu0 0.0
    %545 = vmatprep.subr.mxu0 0.0
    %546 = vmatpush2.msra.mxu0 0.0
    %547 = vmatprep.subr.mxu0 0.0
    %548 = vmatpush2.msra.mxu0 0.0
    %549 = vmatprep.subr.mxu0 0.0
    %550 = vmatpush2.msra.mxu0 0.0
    %551 = vmatprep.subr.mxu0 0.0
    %552 = vmatpush2.msra.mxu0 0.0
    %553 = vmatprep.subr.mxu0 0.0
    %554 = vmatpush2.msra.mxu0 0.0
    %555 = vmatprep.mubr.f32.mxu0 0.0
    %556 = vmatmul.mubr.f32.gmra.mxu0 %v379
    %v557 = vpop.f32.mrf.mxu0
    %v558 = vadd.f32 %v483, %v557
    %v559 = vpop.f32.mrf.mxu0
    %560 = vmatprep.mubr.f32.mxu0 0.0
    %561 = vmatmul.mubr.f32.gmra.mxu0 %v380
    %v562 = vpop.f32.mrf.mxu0
    %v563 = vadd.f32 %v488, %v562
    %v564 = vpop.f32.mrf.mxu0
    %565 = vdwg.mxu0
    %v566 = vld [vmem:[#allocation2 + $0x2] sm:$0xff]
    %v567 = vld [vmem:[#allocation2 + $0xa] sm:$0xff]
    %s568 = scalar_lea.vmem [#allocation8], 256
    %v569 = vld [vmem:[%s568] sm:$0xff]
    %v570 = vld [vmem:[%s568 + $0x8] sm:$0xff]
    %v571 = vld [vmem:[%s568 + $0x10] sm:$0xff]
    %v572 = vld [vmem:[%s568 + $0x18] sm:$0xff]
    %v573 = vld [vmem:[%s568 + $0x20] sm:$0xff]
    %v574 = vld [vmem:[%s568 + $0x28] sm:$0xff]
    %v575 = vld [vmem:[%s568 + $0x30] sm:$0xff]
    %v576 = vld [vmem:[%s568 + $0x38] sm:$0xff]
    %v577 = vld [vmem:[%s568 + $0x40] sm:$0xff]
    %v578 = vld [vmem:[%s568 + $0x48] sm:$0xff]
    %v579 = vld [vmem:[%s568 + $0x50] sm:$0xff]
    %v580 = vld [vmem:[%s568 + $0x58] sm:$0xff]
    %v581 = vld [vmem:[%s568 + $0x60] sm:$0xff]
    %v582 = vld [vmem:[%s568 + $0x68] sm:$0xff]
    %v583 = vld [vmem:[%s568 + $0x70] sm:$0xff]
    %v584 = vld [vmem:[%s568 + $0x78] sm:$0xff]
    %585 = vmatprep.subr.mxu0 0.0
    %586 = vmatpush1.msra.mxu0 %v584
    %587 = vmatprep.subr.mxu0 0.0
    %588 = vmatpush1.msra.mxu0 %v583
    %589 = vmatprep.subr.mxu0 0.0
    %590 = vmatpush1.msra.mxu0 %v582
    %591 = vmatprep.subr.mxu0 0.0
    %592 = vmatpush1.msra.mxu0 %v581
    %593 = vmatprep.subr.mxu0 0.0
    %594 = vmatpush1.msra.mxu0 %v580
    %595 = vmatprep.subr.mxu0 0.0
    %596 = vmatpush1.msra.mxu0 %v579
    %597 = vmatprep.subr.mxu0 0.0
    %598 = vmatpush1.msra.mxu0 %v578
    %599 = vmatprep.subr.mxu0 0.0
    %600 = vmatpush1.msra.mxu0 %v577
    %601 = vmatprep.subr.mxu0 0.0
    %602 = vmatpush1.msra.mxu0 %v576
    %603 = vmatprep.subr.mxu0 0.0
    %604 = vmatpush1.msra.mxu0 %v575
    %605 = vmatprep.subr.mxu0 0.0
    %606 = vmatpush1.msra.mxu0 %v574
    %607 = vmatprep.subr.mxu0 0.0
    %608 = vmatpush1.msra.mxu0 %v573
    %609 = vmatprep.subr.mxu0 0.0
    %610 = vmatpush1.msra.mxu0 %v572
    %611 = vmatprep.subr.mxu0 0.0
    %612 = vmatpush1.msra.mxu0 %v571
    %613 = vmatprep.subr.mxu0 0.0
    %614 = vmatpush1.msra.mxu0 %v570
    %615 = vmatprep.subr.mxu0 0.0
    %616 = vmatpush1.msra.mxu0 %v569
    %617 = vmatprep.subr.mxu0 0.0
    %618 = vmatpush2.msra.mxu0 0.0
    %619 = vmatprep.subr.mxu0 0.0
    %620 = vmatpush2.msra.mxu0 0.0
    %621 = vmatprep.subr.mxu0 0.0
    %622 = vmatpush2.msra.mxu0 0.0
    %623 = vmatprep.subr.mxu0 0.0
    %624 = vmatpush2.msra.mxu0 0.0
    %625 = vmatprep.subr.mxu0 0.0
    %626 = vmatpush2.msra.mxu0 0.0
    %627 = vmatprep.subr.mxu0 0.0
    %628 = vmatpush2.msra.mxu0 0.0
    %629 = vmatprep.subr.mxu0 0.0
    %630 = vmatpush2.msra.mxu0 0.0
    %631 = vmatprep.subr.mxu0 0.0
    %632 = vmatpush2.msra.mxu0 0.0
    %633 = vmatprep.subr.mxu0 0.0
    %634 = vmatpush2.msra.mxu0 0.0
    %635 = vmatprep.subr.mxu0 0.0
    %636 = vmatpush2.msra.mxu0 0.0
    %637 = vmatprep.subr.mxu0 0.0
    %638 = vmatpush2.msra.mxu0 0.0
    %639 = vmatprep.subr.mxu0 0.0
    %640 = vmatpush2.msra.mxu0 0.0
    %641 = vmatprep.subr.mxu0 0.0
    %642 = vmatpush2.msra.mxu0 0.0
    %643 = vmatprep.subr.mxu0 0.0
    %644 = vmatpush2.msra.mxu0 0.0
    %645 = vmatprep.subr.mxu0 0.0
    %646 = vmatpush2.msra.mxu0 0.0
    %647 = vmatprep.subr.mxu0 0.0
    %648 = vmatpush2.msra.mxu0 0.0
    %649 = vmatprep.mubr.f32.mxu0 0.0
    %650 = vmatmul.mubr.f32.gmra.mxu0 %v566
    %v651 = vpop.f32.mrf.mxu0
    %v652 = vadd.f32 0.0, %v651
    %v653 = vpop.f32.mrf.mxu0
    %654 = vmatprep.mubr.f32.mxu0 0.0
    %655 = vmatmul.mubr.f32.gmra.mxu0 %v567
    %v656 = vpop.f32.mrf.mxu0
    %v657 = vadd.f32 0.0, %v656
    %v658 = vpop.f32.mrf.mxu0
    %659 = vdwg.mxu0
    %v660 = vadd.f32 %v558, %v652
    %v661 = vadd.f32 %v563, %v657
    %v662 = vld [vmem:[%s5] sm:$0x1]
    %v664 = vlaneseq
    %v665 = vshrl.u32 %v664, 7
    %v666 = vsub.s32 0, %v665
    %v667 = vrot.slane %v662, %v666
    %v669 = vmul.f32 %v660, %v667
    %v670 = vmul.f32 %v661, %v667
    %v671 = vld [vmem:[%s6] sm:$0x1]
    %v673 = vlaneseq
    %v674 = vshrl.u32 %v673, 7
    %v675 = vsub.s32 0, %v674
    %v676 = vrot.slane %v671, %v675
    %v678 = vadd.f32 %v669, %v676
    %v679 = vadd.f32 %v670, %v676
    %v680 = vadd.f32 %v678, %v68
    %v681 = vadd.f32 %v679, %v69
    %v682 = vmax.f32 %v680, 0.0
    %v683 = vmax.f32 %v681, 0.0
    %684 = vst [vmem:[#allocation9] sm:$0xff] %v682
    %685 = vst [vmem:[#allocation9 + $0x8] sm:$0xff] %v683
    // Predicated region
    $region42: #{tpu_custom_call.1} parent=1 // pred_check
      _
    $region43: #{tpu_custom_call.1} parent=1 // pred_check_branch
      %687 = sbr.rel (0) target = $region45
    $region44: #{tpu_custom_call.1} parent=1 // pred_region
      %s689 = ssub.s32 256, 256
      %690 = vsyncadd [#allocation5], %s689
      %s691 = sshll.u32 [#allocation9], 4
      %s692 = int_to_ptr.vmem [resolvable:$true] %s691
      %697 = dma.vmem_to_hbm [thread:$0]  %s692, 256, %s7, [#allocation5], 128, 128, 8
    $region45: #{tpu_custom_call.1} parent=1 // pred_fallthru
      _
    // Predicated region
    $region46: #{tpu_custom_call.1} parent=1 // pred_check
      _
    $region47: #{tpu_custom_call.1} parent=1 // pred_check_branch
      %699 = sbr.rel (0) target = $region49
    $region48: #{tpu_custom_call.1} parent=1 // pred_region
      %700 = dma.done [#allocation5], 256
    $region49: #{tpu_custom_call.1} parent=1 // pred_fallthru
      _
    %701 = vsyncpa [#allocation4], 1
    %702 = vsyncpa [#allocation7], 1
    %703 = vsyncpa [#allocation5], 1

</llo_original>
